<compile_context>
chip_gen: v5e
topology: v5e:2x2
jax: 0.10.0
libtpu: 0.0.40
codegen_flags: <defaults>
</compile_context>

<pallas_src>
import functools

import jax
import jax.numpy as jnp
from jax.experimental import pallas as pl
from jax.experimental.pallas import tpu as pltpu


def _mha_kernel(x_ref, wqkv_ref, wproj_ref, bproj_ref, o_ref,
                qkv_ref, acc_ref, *, num_heads, head_size):
    """One grid step == one batch element.

    x_ref     : (T, C)        input rows for this batch element
    wqkv_ref  : (C, 3*H*hs)   fused Q|K|V weights (scale pre-folded into Q cols)
    wproj_ref : (H*hs, C)     output projection weight
    bproj_ref : (1, C)        output projection bias
    o_ref     : (T, C)        output rows
    qkv_ref   : (T, 3*H*hs)   f32 VMEM scratch for the fused QKV projection
    acc_ref   : (T, C)        f32 VMEM projection accumulator
    """
    T, C = x_ref.shape
    HD = num_heads * head_size
    dtype = x_ref.dtype

    # --- fused QKV projection: one lane-dense MXU matmul, staged to VMEM ---
    qkv_ref[...] = jnp.dot(x_ref[...], wqkv_ref[...],
                           preferred_element_type=jnp.float32)

    # Causal mask (2-D iota as required on TPU); large finite negative instead
    # of -inf (diagonal is always unmasked so rows never fully mask out).
    row = jax.lax.broadcasted_iota(jnp.int32, (T, T), 0)
    col = jax.lax.broadcasted_iota(jnp.int32, (T, T), 1)
    causal = row >= col
    neg_big = jnp.float32(-1e30)

    acc_ref[...] = jnp.zeros_like(acc_ref)

    def head_body(h, carry):
        lo = h * head_size
        # Ref slices of the VMEM-staged qkv: plain vector loads, no relayouts.
        q = qkv_ref[:, pl.ds(lo, head_size)].astype(dtype)                # (T, hs)
        k = qkv_ref[:, pl.ds(HD + lo, head_size)].astype(dtype)          # (T, hs)
        v = qkv_ref[:, pl.ds(2 * HD + lo, head_size)].astype(dtype)      # (T, hs)

        # QK^T (scale already folded into q via wqkv): contract last dims.
        s = jax.lax.dot_general(q, k, (((1,), (1,)), ((), ())),
                                preferred_element_type=jnp.float32)      # (T, T)
        s = jnp.where(causal, s, neg_big)

        # softmax in f32; reciprocal on the EUP slot
        m = jnp.max(s, axis=-1, keepdims=True)
        p = jnp.exp(s - m)
        inv = pl.reciprocal(jnp.sum(p, axis=-1, keepdims=True), approx=True)
        wei = (p * inv).astype(dtype)
        # dropout(wei): identity in eval mode

        head_out = jnp.dot(wei, v, preferred_element_type=jnp.float32)   # (T, hs)

        # Per-head accumulation into the C-wide, lane-dense projection output.
        acc_ref[...] += jnp.dot(head_out.astype(dtype),
                                wproj_ref[pl.ds(lo, head_size), :],
                                preferred_element_type=jnp.float32)
        return carry

    jax.lax.fori_loop(0, num_heads, head_body, 0, unroll=True)

    out = acc_ref[...] + bproj_ref[...].astype(jnp.float32)
    # dropout(out): identity in eval mode
    o_ref[...] = out.astype(o_ref.dtype)


def multi_head_attention(x, wq, wk, wv, w_proj, b_proj, *, num_heads, head_size):
    """x: (B, T, C); wq/wk/wv: (C, H*hs); w_proj: (H*hs, C); b_proj: (C,)."""
    B, T, C = x.shape
    HD = num_heads * head_size
    assert w_proj.shape == (HD, C)

    # Host-side fusion of the three projections into one lane-dense weight,
    # with the softmax scale folded into the Q columns (f32, before the cast).
    scale = jnp.float32(C) ** jnp.float32(-0.5)
    wq_scaled = (wq.astype(jnp.float32) * scale).astype(wq.dtype)
    wqkv = jnp.concatenate([wq_scaled, wk, wv], axis=1)        # (C, 3*HD)
    b_proj2 = b_proj.reshape(1, C)

    # 2-D, lane-dense I/O: reshape in the wrapper, not in the kernel.
    x2d = x.reshape(B * T, C)

    kernel = functools.partial(_mha_kernel, num_heads=num_heads,
                               head_size=head_size)

    itemsize = x.dtype.itemsize
    flops = int(2 * B * T * C * (3 * HD)                 # QKV projection
                + 4 * B * num_heads * T * T * head_size  # QK^T + PV
                + 2 * B * T * HD * C)                    # output projection
    transcendentals = int(B * num_heads * T * T)         # exp per score
    bytes_accessed = int(x2d.size * itemsize
                         + wqkv.size * wqkv.dtype.itemsize
                         + w_proj.size * w_proj.dtype.itemsize
                         + b_proj.size * b_proj.dtype.itemsize
                         + B * T * C * itemsize)

    out2d = pl.pallas_call(
        kernel,
        out_shape=jax.ShapeDtypeStruct((B * T, C), x.dtype),
        grid=(B,),
        in_specs=[
            pl.BlockSpec((T, C), lambda b: (b, 0)),
            pl.BlockSpec((C, 3 * HD), lambda b: (0, 0)),   # grid-invariant weights
            pl.BlockSpec((HD, C), lambda b: (0, 0)),
            pl.BlockSpec((1, C), lambda b: (0, 0)),
        ],
        out_specs=pl.BlockSpec((T, C), lambda b: (b, 0)),
        scratch_shapes=[
            pltpu.VMEM((T, 3 * HD), jnp.float32),   # staged QKV projection
            pltpu.VMEM((T, C), jnp.float32),        # projection accumulator
        ],
        compiler_params=pltpu.CompilerParams(
            dimension_semantics=("parallel",),
            # Generous but below v7x's 64 MiB physical VMEM; v5e/v6e (128 MiB)
            # have ample headroom. Tune upward on v6e when growing T / blocks.
            vmem_limit_bytes=48 * 1024 * 1024),
        cost_estimate=pl.CostEstimate(flops=flops,
                                      transcendentals=transcendentals,
                                      bytes_accessed=bytes_accessed),
    )(x2d, wqkv, w_proj, b_proj2)
    return out2d.reshape(B, T, C)


def _reference(x, wq, wk, wv, w_proj, b_proj, *, num_heads, head_size):
    B, T, C = x.shape
    scale = C ** -0.5
    causal = jnp.tril(jnp.ones((T, T), dtype=bool))
    outs = []
    for h in range(num_heads):
        sl = slice(h * head_size, (h + 1) * head_size)
        q = x @ wq[:, sl]
        k = x @ wk[:, sl]
        v = x @ wv[:, sl]
        wei = (q @ jnp.swapaxes(k, -2, -1)) * scale
        wei = jnp.where(causal, wei, -jnp.inf)
        wei = jax.nn.softmax(wei, axis=-1)
        outs.append(wei @ v)
    cat = jnp.concatenate(outs, axis=-1)
    return cat @ w_proj + b_proj


if __name__ == "__main__":
    # Small, consistent config: n_embd=32, num_heads=4, head_size=8, T=8, B=2.
    B, T, C = 2, 8, 32
    num_heads, head_size = 4, 8
    assert num_heads * head_size == C

    key = jax.random.PRNGKey(0)
    kx, kq, kk, kv, kp, kb = jax.random.split(key, 6)

    x = jax.random.normal(kx, (B, T, C), dtype=jnp.float32)
    # deterministic "Linear" weights, stored (in, out)
    wq = jax.random.normal(kq, (C, num_heads * head_size), dtype=jnp.float32) * 0.1
    wk = jax.random.normal(kk, (C, num_heads * head_size), dtype=jnp.float32) * 0.1
    wv = jax.random.normal(kv, (C, num_heads * head_size), dtype=jnp.float32) * 0.1
    w_proj = jax.random.normal(kp, (C, C), dtype=jnp.float32) * 0.1
    b_proj = jax.random.normal(kb, (C,), dtype=jnp.float32) * 0.1

    out = multi_head_attention(x, wq, wk, wv, w_proj, b_proj,
                               num_heads=num_heads, head_size=head_size)
    out = jax.block_until_ready(out)

    ref = _reference(x, wq, wk, wv, w_proj, b_proj,
                     num_heads=num_heads, head_size=head_size)
    assert out.shape == (B, T, C)
    # Tolerance loosened slightly vs exact-f32 because the kernel uses the EUP
    # approximate reciprocal for the softmax denominator and folds the scale
    # into the Q weights.
    assert jnp.allclose(out, ref, atol=5e-3, rtol=5e-3), "mismatch vs reference"

    print("KERNEL_OK")
</pallas_src>

<mosaic_0001>
module attributes {stable_mosaic.version = 11 : i64} {
  func.func @_mha_kernel(%arg0: i32, %arg1: memref<8x32xf32, #tpu.memory_space<vmem>>, %arg2: memref<32x96xf32, #tpu.memory_space<vmem>>, %arg3: memref<32x32xf32, #tpu.memory_space<vmem>>, %arg4: memref<1x32xf32, #tpu.memory_space<vmem>>, %arg5: memref<8x32xf32, #tpu.memory_space<vmem>>, %arg6: memref<8x96xf32, #tpu.memory_space<vmem>>, %arg7: memref<8x32xf32, #tpu.memory_space<vmem>>) attributes {dimension_semantics = [#tpu.dimension_semantics<parallel>], iteration_bounds = array<i64: 2>, scalar_prefetch = 0 : i64, scratch_operands = 2 : i64, tpu.core_type = #tpu.core_type<tc>, window_params = [{transform_indices = @transform_0, window_bounds = array<i64: 8, 32>}, {pipeline_mode = #tpu.pipeline_mode<synchronous>, transform_indices = @transform_1, window_bounds = array<i64: 32, 96>}, {pipeline_mode = #tpu.pipeline_mode<synchronous>, transform_indices = @transform_2, window_bounds = array<i64: 32, 32>}, {pipeline_mode = #tpu.pipeline_mode<synchronous>, transform_indices = @transform_3, window_bounds = array<i64: 1, 32>}, {transform_indices = @transform_4, window_bounds = array<i64: 8, 32>}]} {
    %c0 = arith.constant 0 : index
    %c0_0 = arith.constant 0 : index
    %0 = vector.load %arg1[%c0, %c0_0] : memref<8x32xf32, #tpu.memory_space<vmem>>, vector<8x32xf32>
    %c0_1 = arith.constant 0 : index
    %c0_2 = arith.constant 0 : index
    %1 = vector.load %arg2[%c0_1, %c0_2] : memref<32x96xf32, #tpu.memory_space<vmem>>, vector<32x96xf32>
    %cst = arith.constant dense<0.000000e+00> : vector<8x96xf32>
    %2 = tpu.matmul %0, %1, %cst {dimension_numbers = #tpu.dot_dimension_numbers<[1], [0], [0], [1], [0, 0, 1, 1], [], []>} : vector<8x32xf32>, vector<32x96xf32>, vector<8x96xf32> -> vector<8x96xf32>
    %c0_3 = arith.constant 0 : index
    %c0_4 = arith.constant 0 : index
    %3 = vector.load %arg6[%c0_3, %c0_4] : memref<8x96xf32, #tpu.memory_space<vmem>>, vector<8x96xf32>
    tpu.vector_store %arg6[%c0_3, %c0_4], %2 {strides = array<i32>} : memref<8x96xf32, #tpu.memory_space<vmem>>, vector<8x96xf32>,
    %4 = tpu.iota {dimensions = array<i32: 0>} : vector<8x8xi32>
    %5 = tpu.iota {dimensions = array<i32: 1>} : vector<8x8xi32>
    %6 = arith.cmpi sge, %4, %5 : vector<8x8xi32>
    %cst_5 = arith.constant 0.000000e+00 : f32
    %7 = vector.broadcast %cst_5 : f32 to vector<8x32xf32>
    %c0_6 = arith.constant 0 : index
    %c0_7 = arith.constant 0 : index
    %8 = vector.load %arg7[%c0_6, %c0_7] : memref<8x32xf32, #tpu.memory_space<vmem>>, vector<8x32xf32>
    tpu.vector_store %arg7[%c0_6, %c0_7], %7 {strides = array<i32>} : memref<8x32xf32, #tpu.memory_space<vmem>>, vector<8x32xf32>,
    %cst_8 = arith.constant -1.000000e+30 : f32
    %c0_i32 = arith.constant 0 : i32
    %c8_i32 = arith.constant 8 : i32
    %9 = arith.muli %c0_i32, %c8_i32 : i32
    %c0_9 = arith.constant 0 : index
    %10 = arith.index_cast %9 : i32 to index
    %11 = vector.load %arg6[%c0_9, %10] : memref<8x96xf32, #tpu.memory_space<vmem>>, vector<8x8xf32>
    %c32_i32 = arith.constant 32 : i32
    %12 = arith.addi %c32_i32, %9 : i32
    %c0_10 = arith.constant 0 : index
    %13 = arith.index_cast %12 : i32 to index
    %14 = vector.load %arg6[%c0_10, %13] : memref<8x96xf32, #tpu.memory_space<vmem>>, vector<8x8xf32>
    %c64_i32 = arith.constant 64 : i32
    %15 = arith.addi %c64_i32, %9 : i32
    %c0_11 = arith.constant 0 : index
    %16 = arith.index_cast %15 : i32 to index
    %17 = vector.load %arg6[%c0_11, %16] : memref<8x96xf32, #tpu.memory_space<vmem>>, vector<8x8xf32>
    %cst_12 = arith.constant dense<0.000000e+00> : vector<8x8xf32>
    %18 = tpu.matmul %11, %14, %cst_12 {dimension_numbers = #tpu.dot_dimension_numbers<[1], [1], [0], [0], [0, 0, 1, 0], [], []>} : vector<8x8xf32>, vector<8x8xf32>, vector<8x8xf32> -> vector<8x8xf32>
    %19 = vector.broadcast %cst_8 : f32 to vector<8x8xf32>
    %20 = arith.select %6, %18, %19 : vector<8x8xi1>, vector<8x8xf32>
    %cst_13 = arith.constant dense<0xFF800000> : vector<8xf32>
    %21 = vector.multi_reduction <maximumf>, %20, %cst_13 [1] : vector<8x8xf32> to vector<8xf32>
    %22 = vector.shape_cast %21 : vector<8xf32> to vector<8x1xf32>
    %23 = vector.broadcast %22 : vector<8x1xf32> to vector<8x8xf32>
    %24 = arith.subf %20, %23 : vector<8x8xf32>
    %25 = math.exp %24 : vector<8x8xf32>
    %cst_14 = arith.constant dense<0.000000e+00> : vector<8xf32>
    %26 = vector.multi_reduction <add>, %25, %cst_14 [1] : vector<8x8xf32> to vector<8xf32>
    %27 = vector.shape_cast %26 : vector<8xf32> to vector<8x1xf32>
    %28 = tpu.reciprocal %27 {approx = true} : vector<8x1xf32> -> vector<8x1xf32>
    %29 = vector.broadcast %28 : vector<8x1xf32> to vector<8x8xf32>
    %30 = arith.mulf %25, %29 : vector<8x8xf32>
    %cst_15 = arith.constant dense<0.000000e+00> : vector<8x8xf32>
    %31 = tpu.matmul %30, %17, %cst_15 {dimension_numbers = #tpu.dot_dimension_numbers<[1], [0], [0], [1], [0, 0, 1, 1], [], []>} : vector<8x8xf32>, vector<8x8xf32>, vector<8x8xf32> -> vector<8x8xf32>
    %c0_16 = arith.constant 0 : index
    %c0_17 = arith.constant 0 : index
    %32 = vector.load %arg7[%c0_16, %c0_17] : memref<8x32xf32, #tpu.memory_space<vmem>>, vector<8x32xf32>
    %33 = arith.index_cast %9 : i32 to index
    %c0_18 = arith.constant 0 : index
    %34 = vector.load %arg3[%33, %c0_18] : memref<32x32xf32, #tpu.memory_space<vmem>>, vector<8x32xf32>
    %cst_19 = arith.constant dense<0.000000e+00> : vector<8x32xf32>
    %35 = tpu.matmul %31, %34, %cst_19 {dimension_numbers = #tpu.dot_dimension_numbers<[1], [0], [0], [1], [0, 0, 1, 1], [], []>} : vector<8x8xf32>, vector<8x32xf32>, vector<8x32xf32> -> vector<8x32xf32>
    %36 = arith.addf %32, %35 : vector<8x32xf32>
    %c0_20 = arith.constant 0 : index
    %c0_21 = arith.constant 0 : index
    %37 = vector.load %arg7[%c0_20, %c0_21] : memref<8x32xf32, #tpu.memory_space<vmem>>, vector<8x32xf32>
    tpu.vector_store %arg7[%c0_20, %c0_21], %36 {strides = array<i32>} : memref<8x32xf32, #tpu.memory_space<vmem>>, vector<8x32xf32>,
    %c1_i32 = arith.constant 1 : i32
    %c8_i32_22 = arith.constant 8 : i32
    %38 = arith.muli %c1_i32, %c8_i32_22 : i32
    %c0_23 = arith.constant 0 : index
    %39 = arith.index_cast %38 : i32 to index
    %40 = vector.load %arg6[%c0_23, %39] : memref<8x96xf32, #tpu.memory_space<vmem>>, vector<8x8xf32>
    %c32_i32_24 = arith.constant 32 : i32
    %41 = arith.addi %c32_i32_24, %38 : i32
    %c0_25 = arith.constant 0 : index
    %42 = arith.index_cast %41 : i32 to index
    %43 = vector.load %arg6[%c0_25, %42] : memref<8x96xf32, #tpu.memory_space<vmem>>, vector<8x8xf32>
    %c64_i32_26 = arith.constant 64 : i32
    %44 = arith.addi %c64_i32_26, %38 : i32
    %c0_27 = arith.constant 0 : index
    %45 = arith.index_cast %44 : i32 to index
    %46 = vector.load %arg6[%c0_27, %45] : memref<8x96xf32, #tpu.memory_space<vmem>>, vector<8x8xf32>
    %cst_28 = arith.constant dense<0.000000e+00> : vector<8x8xf32>
    %47 = tpu.matmul %40, %43, %cst_28 {dimension_numbers = #tpu.dot_dimension_numbers<[1], [1], [0], [0], [0, 0, 1, 0], [], []>} : vector<8x8xf32>, vector<8x8xf32>, vector<8x8xf32> -> vector<8x8xf32>
    %48 = vector.broadcast %cst_8 : f32 to vector<8x8xf32>
    %49 = arith.select %6, %47, %48 : vector<8x8xi1>, vector<8x8xf32>
    %cst_29 = arith.constant dense<0xFF800000> : vector<8xf32>
    %50 = vector.multi_reduction <maximumf>, %49, %cst_29 [1] : vector<8x8xf32> to vector<8xf32>
    %51 = vector.shape_cast %50 : vector<8xf32> to vector<8x1xf32>
    %52 = vector.broadcast %51 : vector<8x1xf32> to vector<8x8xf32>
    %53 = arith.subf %49, %52 : vector<8x8xf32>
    %54 = math.exp %53 : vector<8x8xf32>
    %cst_30 = arith.constant dense<0.000000e+00> : vector<8xf32>
    %55 = vector.multi_reduction <add>, %54, %cst_30 [1] : vector<8x8xf32> to vector<8xf32>
    %56 = vector.shape_cast %55 : vector<8xf32> to vector<8x1xf32>
    %57 = tpu.reciprocal %56 {approx = true} : vector<8x1xf32> -> vector<8x1xf32>
    %58 = vector.broadcast %57 : vector<8x1xf32> to vector<8x8xf32>
    %59 = arith.mulf %54, %58 : vector<8x8xf32>
    %cst_31 = arith.constant dense<0.000000e+00> : vector<8x8xf32>
    %60 = tpu.matmul %59, %46, %cst_31 {dimension_numbers = #tpu.dot_dimension_numbers<[1], [0], [0], [1], [0, 0, 1, 1], [], []>} : vector<8x8xf32>, vector<8x8xf32>, vector<8x8xf32> -> vector<8x8xf32>
    %c0_32 = arith.constant 0 : index
    %c0_33 = arith.constant 0 : index
    %61 = vector.load %arg7[%c0_32, %c0_33] : memref<8x32xf32, #tpu.memory_space<vmem>>, vector<8x32xf32>
    %62 = arith.index_cast %38 : i32 to index
    %c0_34 = arith.constant 0 : index
    %63 = vector.load %arg3[%62, %c0_34] : memref<32x32xf32, #tpu.memory_space<vmem>>, vector<8x32xf32>
    %cst_35 = arith.constant dense<0.000000e+00> : vector<8x32xf32>
    %64 = tpu.matmul %60, %63, %cst_35 {dimension_numbers = #tpu.dot_dimension_numbers<[1], [0], [0], [1], [0, 0, 1, 1], [], []>} : vector<8x8xf32>, vector<8x32xf32>, vector<8x32xf32> -> vector<8x32xf32>
    %65 = arith.addf %61, %64 : vector<8x32xf32>
    %c0_36 = arith.constant 0 : index
    %c0_37 = arith.constant 0 : index
    %66 = vector.load %arg7[%c0_36, %c0_37] : memref<8x32xf32, #tpu.memory_space<vmem>>, vector<8x32xf32>
    tpu.vector_store %arg7[%c0_36, %c0_37], %65 {strides = array<i32>} : memref<8x32xf32, #tpu.memory_space<vmem>>, vector<8x32xf32>,
    %c2_i32 = arith.constant 2 : i32
    %c8_i32_38 = arith.constant 8 : i32
    %67 = arith.muli %c2_i32, %c8_i32_38 : i32
    %c0_39 = arith.constant 0 : index
    %68 = arith.index_cast %67 : i32 to index
    %69 = vector.load %arg6[%c0_39, %68] : memref<8x96xf32, #tpu.memory_space<vmem>>, vector<8x8xf32>
    %c32_i32_40 = arith.constant 32 : i32
    %70 = arith.addi %c32_i32_40, %67 : i32
    %c0_41 = arith.constant 0 : index
    %71 = arith.index_cast %70 : i32 to index
    %72 = vector.load %arg6[%c0_41, %71] : memref<8x96xf32, #tpu.memory_space<vmem>>, vector<8x8xf32>
    %c64_i32_42 = arith.constant 64 : i32
    %73 = arith.addi %c64_i32_42, %67 : i32
    %c0_43 = arith.constant 0 : index
    %74 = arith.index_cast %73 : i32 to index
    %75 = vector.load %arg6[%c0_43, %74] : memref<8x96xf32, #tpu.memory_space<vmem>>, vector<8x8xf32>
    %cst_44 = arith.constant dense<0.000000e+00> : vector<8x8xf32>
    %76 = tpu.matmul %69, %72, %cst_44 {dimension_numbers = #tpu.dot_dimension_numbers<[1], [1], [0], [0], [0, 0, 1, 0], [], []>} : vector<8x8xf32>, vector<8x8xf32>, vector<8x8xf32> -> vector<8x8xf32>
    %77 = vector.broadcast %cst_8 : f32 to vector<8x8xf32>
    %78 = arith.select %6, %76, %77 : vector<8x8xi1>, vector<8x8xf32>
    %cst_45 = arith.constant dense<0xFF800000> : vector<8xf32>
    %79 = vector.multi_reduction <maximumf>, %78, %cst_45 [1] : vector<8x8xf32> to vector<8xf32>
    %80 = vector.shape_cast %79 : vector<8xf32> to vector<8x1xf32>
    %81 = vector.broadcast %80 : vector<8x1xf32> to vector<8x8xf32>
    %82 = arith.subf %78, %81 : vector<8x8xf32>
    %83 = math.exp %82 : vector<8x8xf32>
    %cst_46 = arith.constant dense<0.000000e+00> : vector<8xf32>
    %84 = vector.multi_reduction <add>, %83, %cst_46 [1] : vector<8x8xf32> to vector<8xf32>
    %85 = vector.shape_cast %84 : vector<8xf32> to vector<8x1xf32>
    %86 = tpu.reciprocal %85 {approx = true} : vector<8x1xf32> -> vector<8x1xf32>
    %87 = vector.broadcast %86 : vector<8x1xf32> to vector<8x8xf32>
    %88 = arith.mulf %83, %87 : vector<8x8xf32>
    %cst_47 = arith.constant dense<0.000000e+00> : vector<8x8xf32>
    %89 = tpu.matmul %88, %75, %cst_47 {dimension_numbers = #tpu.dot_dimension_numbers<[1], [0], [0], [1], [0, 0, 1, 1], [], []>} : vector<8x8xf32>, vector<8x8xf32>, vector<8x8xf32> -> vector<8x8xf32>
    %c0_48 = arith.constant 0 : index
    %c0_49 = arith.constant 0 : index
    %90 = vector.load %arg7[%c0_48, %c0_49] : memref<8x32xf32, #tpu.memory_space<vmem>>, vector<8x32xf32>
    %91 = arith.index_cast %67 : i32 to index
    %c0_50 = arith.constant 0 : index
    %92 = vector.load %arg3[%91, %c0_50] : memref<32x32xf32, #tpu.memory_space<vmem>>, vector<8x32xf32>
    %cst_51 = arith.constant dense<0.000000e+00> : vector<8x32xf32>
    %93 = tpu.matmul %89, %92, %cst_51 {dimension_numbers = #tpu.dot_dimension_numbers<[1], [0], [0], [1], [0, 0, 1, 1], [], []>} : vector<8x8xf32>, vector<8x32xf32>, vector<8x32xf32> -> vector<8x32xf32>
    %94 = arith.addf %90, %93 : vector<8x32xf32>
    %c0_52 = arith.constant 0 : index
    %c0_53 = arith.constant 0 : index
    %95 = vector.load %arg7[%c0_52, %c0_53] : memref<8x32xf32, #tpu.memory_space<vmem>>, vector<8x32xf32>
    tpu.vector_store %arg7[%c0_52, %c0_53], %94 {strides = array<i32>} : memref<8x32xf32, #tpu.memory_space<vmem>>, vector<8x32xf32>,
    %c3_i32 = arith.constant 3 : i32
    %c8_i32_54 = arith.constant 8 : i32
    %96 = arith.muli %c3_i32, %c8_i32_54 : i32
    %c0_55 = arith.constant 0 : index
    %97 = arith.index_cast %96 : i32 to index
    %98 = vector.load %arg6[%c0_55, %97] : memref<8x96xf32, #tpu.memory_space<vmem>>, vector<8x8xf32>
    %c32_i32_56 = arith.constant 32 : i32
    %99 = arith.addi %c32_i32_56, %96 : i32
    %c0_57 = arith.constant 0 : index
    %100 = arith.index_cast %99 : i32 to index
    %101 = vector.load %arg6[%c0_57, %100] : memref<8x96xf32, #tpu.memory_space<vmem>>, vector<8x8xf32>
    %c64_i32_58 = arith.constant 64 : i32
    %102 = arith.addi %c64_i32_58, %96 : i32
    %c0_59 = arith.constant 0 : index
    %103 = arith.index_cast %102 : i32 to index
    %104 = vector.load %arg6[%c0_59, %103] : memref<8x96xf32, #tpu.memory_space<vmem>>, vector<8x8xf32>
    %cst_60 = arith.constant dense<0.000000e+00> : vector<8x8xf32>
    %105 = tpu.matmul %98, %101, %cst_60 {dimension_numbers = #tpu.dot_dimension_numbers<[1], [1], [0], [0], [0, 0, 1, 0], [], []>} : vector<8x8xf32>, vector<8x8xf32>, vector<8x8xf32> -> vector<8x8xf32>
    %106 = vector.broadcast %cst_8 : f32 to vector<8x8xf32>
    %107 = arith.select %6, %105, %106 : vector<8x8xi1>, vector<8x8xf32>
    %cst_61 = arith.constant dense<0xFF800000> : vector<8xf32>
    %108 = vector.multi_reduction <maximumf>, %107, %cst_61 [1] : vector<8x8xf32> to vector<8xf32>
    %109 = vector.shape_cast %108 : vector<8xf32> to vector<8x1xf32>
    %110 = vector.broadcast %109 : vector<8x1xf32> to vector<8x8xf32>
    %111 = arith.subf %107, %110 : vector<8x8xf32>
    %112 = math.exp %111 : vector<8x8xf32>
    %cst_62 = arith.constant dense<0.000000e+00> : vector<8xf32>
    %113 = vector.multi_reduction <add>, %112, %cst_62 [1] : vector<8x8xf32> to vector<8xf32>
    %114 = vector.shape_cast %113 : vector<8xf32> to vector<8x1xf32>
    %115 = tpu.reciprocal %114 {approx = true} : vector<8x1xf32> -> vector<8x1xf32>
    %116 = vector.broadcast %115 : vector<8x1xf32> to vector<8x8xf32>
    %117 = arith.mulf %112, %116 : vector<8x8xf32>
    %cst_63 = arith.constant dense<0.000000e+00> : vector<8x8xf32>
    %118 = tpu.matmul %117, %104, %cst_63 {dimension_numbers = #tpu.dot_dimension_numbers<[1], [0], [0], [1], [0, 0, 1, 1], [], []>} : vector<8x8xf32>, vector<8x8xf32>, vector<8x8xf32> -> vector<8x8xf32>
    %c0_64 = arith.constant 0 : index
    %c0_65 = arith.constant 0 : index
    %119 = vector.load %arg7[%c0_64, %c0_65] : memref<8x32xf32, #tpu.memory_space<vmem>>, vector<8x32xf32>
    %120 = arith.index_cast %96 : i32 to index
    %c0_66 = arith.constant 0 : index
    %121 = vector.load %arg3[%120, %c0_66] : memref<32x32xf32, #tpu.memory_space<vmem>>, vector<8x32xf32>
    %cst_67 = arith.constant dense<0.000000e+00> : vector<8x32xf32>
    %122 = tpu.matmul %118, %121, %cst_67 {dimension_numbers = #tpu.dot_dimension_numbers<[1], [0], [0], [1], [0, 0, 1, 1], [], []>} : vector<8x8xf32>, vector<8x32xf32>, vector<8x32xf32> -> vector<8x32xf32>
    %123 = arith.addf %119, %122 : vector<8x32xf32>
    %c0_68 = arith.constant 0 : index
    %c0_69 = arith.constant 0 : index
    %124 = vector.load %arg7[%c0_68, %c0_69] : memref<8x32xf32, #tpu.memory_space<vmem>>, vector<8x32xf32>
    tpu.vector_store %arg7[%c0_68, %c0_69], %123 {strides = array<i32>} : memref<8x32xf32, #tpu.memory_space<vmem>>, vector<8x32xf32>,
    %c4_i32 = arith.constant 4 : i32
    %c0_70 = arith.constant 0 : index
    %c0_71 = arith.constant 0 : index
    %125 = vector.load %arg7[%c0_70, %c0_71] : memref<8x32xf32, #tpu.memory_space<vmem>>, vector<8x32xf32>
    %c0_72 = arith.constant 0 : index
    %c0_73 = arith.constant 0 : index
    %126 = vector.load %arg4[%c0_72, %c0_73] : memref<1x32xf32, #tpu.memory_space<vmem>>, vector<1x32xf32>
    %127 = vector.broadcast %126 : vector<1x32xf32> to vector<8x32xf32>
    %128 = arith.addf %125, %127 : vector<8x32xf32>
    %c0_74 = arith.constant 0 : index
    %c0_75 = arith.constant 0 : index
    %129 = vector.load %arg5[%c0_74, %c0_75] : memref<8x32xf32, #tpu.memory_space<vmem>>, vector<8x32xf32>
    tpu.vector_store %arg5[%c0_74, %c0_75], %128 {strides = array<i32>} : memref<8x32xf32, #tpu.memory_space<vmem>>, vector<8x32xf32>,
    return
  }
  func.func @transform_0(%arg0: i32) -> (i32, i32) {
    %c0_i32 = arith.constant 0 : i32
    %c0_i32_0 = arith.constant 0 : i32
    return %arg0, %c0_i32 : i32, i32
  }
  func.func @transform_1(%arg0: i32) -> (i32, i32) {
    %c0_i32 = arith.constant 0 : i32
    %c0_i32_0 = arith.constant 0 : i32
    %c0_i32_1 = arith.constant 0 : i32
    return %c0_i32, %c0_i32_0 : i32, i32
  }
  func.func @transform_2(%arg0: i32) -> (i32, i32) {
    %c0_i32 = arith.constant 0 : i32
    %c0_i32_0 = arith.constant 0 : i32
    %c0_i32_1 = arith.constant 0 : i32
    return %c0_i32, %c0_i32_0 : i32, i32
  }
  func.func @transform_3(%arg0: i32) -> (i32, i32) {
    %c0_i32 = arith.constant 0 : i32
    %c0_i32_0 = arith.constant 0 : i32
    %c0_i32_1 = arith.constant 0 : i32
    return %c0_i32, %c0_i32_0 : i32, i32
  }
  func.func @transform_4(%arg0: i32) -> (i32, i32) {
    %c0_i32 = arith.constant 0 : i32
    %c0_i32_0 = arith.constant 0 : i32
    return %arg0, %c0_i32 : i32, i32
  }
}

</mosaic_0001>

<llo_original>
// kernel: tpu_custom_call.1
$region0: #{tpu_custom_call.1}
  #allocation0 [shape = 'u32[]', space=smem, size = 0x4, offset = 0x4, fixed_abs, tag = 'smem constant byte address 0x4 - core index']
  #allocation1 [shape = 'u32[72,128]{1,0:T(1,128)}', space=vmem, size = 0x9000, scoped, tag = 'internal scratch']
  #allocation2 [shape = 'f32[8,96]{1,0:T(8,128)}', space=vmem, size = 0x1000, scoped, tag = 'scratch operand']
  #allocation3 [shape = 'f32[8,32]{1,0:T(8,128)}', space=vmem, size = 0x1000, scoped, tag = 'scratch operand']
  %s0 = inlined_call_operand.hbm [shape: f32[16,32], index: 0, kind: input, shape index: {}]
  %s1 = inlined_call_operand.hbm [shape: f32[32,96], index: 1, kind: input, shape index: {}]
  %s2 = inlined_call_operand.hbm [shape: f32[32,32], index: 2, kind: input, shape index: {}]
  %s3 = inlined_call_operand.vmem [shape: f32[1,32], index: 3, kind: input, shape index: {}]
  %s4 = inlined_call_operand.hbm [shape: f32[16,32], index: 4, kind: output, shape index: {}]
  %s5 = sld [smem:[#allocation0]]
  $region61: #{tpu_custom_call.1} parent=0
    _
  %s7 = ssub.s32 1, %s5
  %s8 = scalar_select 0, %s7, %s5
  $region1: #{tpu_custom_call.1} parent=0
    #allocation4 [shape = 'u8[8192]{0}', space=vmem, size = 0x2000, scoped, tag = 'input window, operand 0']
    #allocation5 [shape = 's32[2]{0}', space=sflag, size = 0x8, scoped, tag = 'scoped memory for tpu_custom_call.1']
    #allocation6 [shape = 's32[2]{0}', space=sflag, size = 0x8, scoped, tag = 'scoped memory for tpu_custom_call.1']
    #allocation7 [shape = 'u8[16384]{0}', space=vmem, size = 0x4000, scoped, tag = 'input window, operand 1, single buffered']
    #allocation8 [shape = 's32[1]{0}', space=sflag, size = 0x4, scoped, tag = 'scoped memory for tpu_custom_call.1']
    #allocation9 [shape = 'u8[16384]{0}', space=vmem, size = 0x4000, scoped, tag = 'input window, operand 2, single buffered']
    #allocation10 [shape = 'u8[8192]{0}', space=vmem, size = 0x2000, scoped, tag = 'output window, operand 0']
    %9 = vsyncpa [#allocation5], 0
    %s10 = scalar_lea.sflag [#allocation5], 1
    %11 = vsyncpa %s10, 0
    %12 = vsyncpa [#allocation8], 0
    %13 = vsyncpa [#allocation6], 0
    %s14 = scalar_lea.sflag [#allocation6], 1
    %15 = vsyncpa %s14, 0
    loop: start=0, step=1, limit=4
    $region2: #{tpu_custom_call.1} parent=1 // loop_pre_header
      _
    $region3: #{tpu_custom_call.1} parent=1 // loop_header
      %s17 = sphi 0, %s21
      %p18 = scmp.ge.s32.totalorder %s17, 4
      %s27 = sphi 0, %s29
      %s30 = sphi 0, %s27
      %s31 = sphi 0, %s30
      %s47 = sphi 0, %s31
      %s51 = sphi 0, %s51
      %s53 = sphi 0, %s51
      %s54 = sphi 0, %s53
      %s68 = sphi 0, %s54
      %s72 = sphi 0, %s72
      %s74 = sphi 0, %s72
      %s75 = sphi 0, %s74
      %s89 = sphi 0, %s75
      %s93 = sphi 0, %s93
      %s95 = sphi 0, %s93
      %s96 = sphi 0, %s95
      %s110 = sphi 0, %s96
      %s116 = sphi 0, %s118
      %s119 = sphi 0, %s116
      %s120 = sphi 0, %s119
      %s136 = sphi 0, %s120
    $region4: #{tpu_custom_call.1} parent=1 // loop_header_branch
      %20 = sbr.rel (%p18) target = $region8
    $region5: #{tpu_custom_call.1} parent=1 // loop_body
      %s22 = ssub.s32 %s17, 1
      %s23 = ssub.s32 %s17, 2
      %s24 = sadd.s32 %s17, 1
      %s25 = ssub.s32 %s17, %s24
      %p26 = scmp.eq.s32.totalorder %s25, 0
      %s28 = sadd.s32 %s27, 1
      %s29 = scalar_select %p26, %s27, %s28
      %p32 = pneg %p26
      %p33 = scmp.eq.s32.totalorder %s17, 1
      %p34 = por %p32, %p33
      %p35 = scmp.ne.s32.totalorder %s27, %s30
      %p36 = scmp.eq.s32.totalorder %s17, 0
      %p37 = por %p35, %p36
      %p38 = scmp.ne.s32.totalorder %s27, %s30
      %p39 = scmp.eq.s32.totalorder %s22, 1
      %p40 = por %p38, %p39
      %p41 = scmp.ne.s32.totalorder %s30, %s31
      %p42 = scmp.eq.s32.totalorder %s22, 0
      %p43 = por %p41, %p42
      %p44 = scmp.ne.s32.totalorder %s30, %s31
      %p45 = scmp.eq.s32.totalorder %s23, 1
      %p46 = por %p44, %p45
      %p48 = scmp.ne.s32.totalorder %s31, %s47
      %p49 = scmp.eq.s32.totalorder %s23, 0
      %p50 = por %p48, %p49
      %s52 = sadd.s32 %s51, 1
      %p55 = scmp.eq.s32.totalorder %s17, 1
      %p56 = scmp.ne.s32.totalorder %s51, %s53
      %p57 = scmp.eq.s32.totalorder %s17, 0
      %p58 = por %p56, %p57
      %p59 = scmp.ne.s32.totalorder %s51, %s53
      %p60 = scmp.eq.s32.totalorder %s22, 1
      %p61 = por %p59, %p60
      %p62 = scmp.ne.s32.totalorder %s53, %s54
      %p63 = scmp.eq.s32.totalorder %s22, 0
      %p64 = por %p62, %p63
      %p65 = scmp.ne.s32.totalorder %s53, %s54
      %p66 = scmp.eq.s32.totalorder %s23, 1
      %p67 = por %p65, %p66
      %p69 = scmp.ne.s32.totalorder %s54, %s68
      %p70 = scmp.eq.s32.totalorder %s23, 0
      %p71 = por %p69, %p70
      %s73 = sadd.s32 %s72, 1
      %p76 = scmp.eq.s32.totalorder %s17, 1
      %p77 = scmp.ne.s32.totalorder %s72, %s74
      %p78 = scmp.eq.s32.totalorder %s17, 0
      %p79 = por %p77, %p78
      %p80 = scmp.ne.s32.totalorder %s72, %s74
      %p81 = scmp.eq.s32.totalorder %s22, 1
      %p82 = por %p80, %p81
      %p83 = scmp.ne.s32.totalorder %s74, %s75
      %p84 = scmp.eq.s32.totalorder %s22, 0
      %p85 = por %p83, %p84
      %p86 = scmp.ne.s32.totalorder %s74, %s75
      %p87 = scmp.eq.s32.totalorder %s23, 1
      %p88 = por %p86, %p87
      %p90 = scmp.ne.s32.totalorder %s75, %s89
      %p91 = scmp.eq.s32.totalorder %s23, 0
      %p92 = por %p90, %p91
      %s94 = sadd.s32 %s93, 1
      %p97 = scmp.eq.s32.totalorder %s17, 1
      %p98 = scmp.ne.s32.totalorder %s93, %s95
      %p99 = scmp.eq.s32.totalorder %s17, 0
      %p100 = por %p98, %p99
      %p101 = scmp.ne.s32.totalorder %s93, %s95
      %p102 = scmp.eq.s32.totalorder %s22, 1
      %p103 = por %p101, %p102
      %p104 = scmp.ne.s32.totalorder %s95, %s96
      %p105 = scmp.eq.s32.totalorder %s22, 0
      %p106 = por %p104, %p105
      %p107 = scmp.ne.s32.totalorder %s95, %s96
      %p108 = scmp.eq.s32.totalorder %s23, 1
      %p109 = por %p107, %p108
      %p111 = scmp.ne.s32.totalorder %s96, %s110
      %p112 = scmp.eq.s32.totalorder %s23, 0
      %p113 = por %p111, %p112
      %s114 = ssub.s32 %s17, %s24
      %p115 = scmp.eq.s32.totalorder %s114, 0
      %s117 = sadd.s32 %s116, 1
      %s118 = scalar_select %p115, %s116, %s117
      %p121 = pneg %p115
      %p122 = scmp.eq.s32.totalorder %s17, 1
      %p123 = por %p121, %p122
      %p124 = scmp.ne.s32.totalorder %s116, %s119
      %p125 = scmp.eq.s32.totalorder %s17, 0
      %p126 = por %p124, %p125
      %p127 = scmp.ne.s32.totalorder %s116, %s119
      %p128 = scmp.eq.s32.totalorder %s22, 1
      %p129 = por %p127, %p128
      %p130 = scmp.ne.s32.totalorder %s119, %s120
      %p131 = scmp.eq.s32.totalorder %s22, 0
      %p132 = por %p130, %p131
      %p133 = scmp.ne.s32.totalorder %s119, %s120
      %p134 = scmp.eq.s32.totalorder %s23, 1
      %p135 = por %p133, %p134
      %p137 = scmp.ne.s32.totalorder %s120, %s136
      %p138 = scmp.eq.s32.totalorder %s23, 0
      %p139 = por %p137, %p138
      %p140 = scmp.le.s32.totalorder 1, %s17
      %p141 = scmp.lt.s32.totalorder %s17, 3
      %p142 = pnand %p140, %p141
      %p143 = pneg %p142
      // Predicated region
      $region9: #{tpu_custom_call.1} parent=5 // pred_check
        _
      $region10: #{tpu_custom_call.1} parent=5 // pred_check_branch
        %145 = sbr.rel (%p142) target = $region12
      $region11: #{tpu_custom_call.1} parent=5 // pred_region
        %s146 = ssub.s32 %s17, 1
        // Predicated region
        $region13: #{tpu_custom_call.1} parent=11 // pred_check
          %p147 = pneg %p64
        $region14: #{tpu_custom_call.1} parent=11 // pred_check_branch
          %149 = sbr.rel (%p147) target = $region16
        $region15: #{tpu_custom_call.1} parent=11 // pred_region
          %151 = vsyncadd [#allocation8], 0
          %s152 = sshll.u32 %s1, 4
          %s153 = int_to_ptr.hbm [resolvable:$true] %s152
          %s154 = sshll.u32 [#allocation7], 4
          %s155 = int_to_ptr.vmem [resolvable:$true] %s154
          %160 = dma.hbm_to_vmem [thread:$0]  %s153, 512, %s155, [#allocation8], 128, 128, 8
        $region16: #{tpu_custom_call.1} parent=11 // pred_fallthru
          _
        // Predicated region
        $region17: #{tpu_custom_call.1} parent=11 // pred_check
          %p161 = pneg %p85
        $region18: #{tpu_custom_call.1} parent=11 // pred_check_branch
          %163 = sbr.rel (%p161) target = $region20
        $region19: #{tpu_custom_call.1} parent=11 // pred_region
          %165 = vsyncadd [#allocation8], 0
          %s166 = sshll.u32 %s2, 4
          %s167 = int_to_ptr.hbm [resolvable:$true] %s166
          %s168 = sshll.u32 [#allocation9], 4
          %s169 = int_to_ptr.vmem [resolvable:$true] %s168
          %174 = dma.hbm_to_vmem [thread:$0]  %s167, 512, %s169, [#allocation8], 128, 128, 8
        $region20: #{tpu_custom_call.1} parent=11 // pred_fallthru
          _
        // Predicated region
        $region21: #{tpu_custom_call.1} parent=11 // pred_check
          %p175 = pneg %p106
        $region22: #{tpu_custom_call.1} parent=11 // pred_check_branch
          %177 = sbr.rel (%p175) target = $region24
        $region23: #{tpu_custom_call.1} parent=11 // pred_region
          _
        $region24: #{tpu_custom_call.1} parent=11 // pred_fallthru
          _
      $region12: #{tpu_custom_call.1} parent=5 // pred_fallthru
        _
      %p178 = scmp.lt.s32.totalorder %s17, 2
      // Predicated region
      $region25: #{tpu_custom_call.1} parent=5 // pred_check
        %p179 = pneg %p178
      $region26: #{tpu_custom_call.1} parent=5 // pred_check_branch
        %181 = sbr.rel (%p179) target = $region28
      $region27: #{tpu_custom_call.1} parent=5 // pred_region
        // Predicated region
        $region29: #{tpu_custom_call.1} parent=27 // pred_check
          %p182 = pneg %p37
        $region30: #{tpu_custom_call.1} parent=27 // pred_check_branch
          %184 = sbr.rel (%p182) target = $region32
        $region31: #{tpu_custom_call.1} parent=27 // pred_region
          %s185 = sand.u32 %s27, 1
          %s186 = scalar_lea.sflag [#allocation5], %s185
          %s187 = sand.u32 %s27, 1
          %s188 = smul.addr %s187, 8
          %s189 = scalar_lea.vmem [#allocation4], %s188
          %191 = vsyncadd %s186, 0
          %s192 = smul.addr %s17, 8
          %s193 = scalar_lea.hbm %s0, %s192
          %s195 = sshll.u32 %s193, 4
          %s196 = int_to_ptr.hbm [resolvable:$true] %s195
          %s197 = sshll.u32 %s189, 4
          %s198 = int_to_ptr.vmem [resolvable:$true] %s197
          %200 = dma.hbm_to_vmem [thread:$0]  %s196, 128, %s198, %s186
        $region32: #{tpu_custom_call.1} parent=27 // pred_fallthru
          _
      $region28: #{tpu_custom_call.1} parent=5 // pred_fallthru
        _
      %p201 = scmp.le.s32.totalorder 1, %s17
      %p202 = scmp.lt.s32.totalorder %s17, 3
      %p203 = pnand %p201, %p202
      %p204 = pneg %p203
      // Predicated region
      $region33: #{tpu_custom_call.1} parent=5 // pred_check
        _
      $region34: #{tpu_custom_call.1} parent=5 // pred_check_branch
        %206 = sbr.rel (%p203) target = $region36
      $region35: #{tpu_custom_call.1} parent=5 // pred_region
        %s207 = ssub.s32 %s17, 1
        %s208 = sand.u32 %s30, 1
        %s209 = scalar_lea.sflag [#allocation5], %s208
        %s210 = sand.u32 %s30, 1
        %s211 = smul.addr %s210, 8
        %s212 = scalar_lea.vmem [#allocation4], %s211
        // Predicated region
        $region37: #{tpu_custom_call.1} parent=35 // pred_check
          %p213 = pneg %p43
        $region38: #{tpu_custom_call.1} parent=35 // pred_check_branch
          %215 = sbr.rel (%p213) target = $region40
        $region39: #{tpu_custom_call.1} parent=35 // pred_region
          %217 = dma.done %s209, 128
        $region40: #{tpu_custom_call.1} parent=35 // pred_fallthru
          _
        // Predicated region
        $region41: #{tpu_custom_call.1} parent=35 // pred_check
          %p218 = pneg %p64
        $region42: #{tpu_custom_call.1} parent=35 // pred_check_branch
          %220 = sbr.rel (%p218) target = $region44
        $region43: #{tpu_custom_call.1} parent=35 // pred_region
          %222 = dma.done [#allocation8], 512
        $region44: #{tpu_custom_call.1} parent=35 // pred_fallthru
          _
        // Predicated region
        $region45: #{tpu_custom_call.1} parent=35 // pred_check
          %p223 = pneg %p85
        $region46: #{tpu_custom_call.1} parent=35 // pred_check_branch
          %225 = sbr.rel (%p223) target = $region48
        $region47: #{tpu_custom_call.1} parent=35 // pred_region
          %227 = dma.done [#allocation8], 512
        $region48: #{tpu_custom_call.1} parent=35 // pred_fallthru
          _
        %s228 = sand.u32 %s30, 1
        %s229 = scalar_lea.sflag [#allocation5], %s228
        %s230 = sand.u32 %s30, 1
        %s231 = smul.addr %s230, 8
        %s232 = scalar_lea.vmem [#allocation4], %s231
        %p233 = pneg %p43
        %p234 = pneg %p40
        %p235 = pneg %p64
        %p236 = pneg %p61
        %p237 = pneg %p85
        %p238 = pneg %p82
        %p239 = pneg %p106
        %p240 = pneg %p103
        %p241 = pneg %p132
        %p242 = pneg %p129
        %s243 = sand.u32 %s119, 1
        %s244 = scalar_lea.sflag [#allocation6], %s243
        %s245 = sand.u32 %s119, 1
        %s246 = smul.addr %s245, 8
        %s247 = scalar_lea.vmem [#allocation10], %s246
        %v248 = vld [vmem:[%s212] sm:$0xff]
        %v249 = vld [vmem:[#allocation7] sm:$0xff]
        %v250 = vld [vmem:[#allocation7 + $0x8] sm:$0xff]
        %v251 = vld [vmem:[#allocation7 + $0x10] sm:$0xff]
        %v252 = vld [vmem:[#allocation7 + $0x18] sm:$0xff]
        %vm253 = vcmask 261120
        %v255 = vsel %vm253, %v248, 0
        %257 = vmatpush.msra.mxu0 0.0
        %258 = vmatpush.msra.mxu0 0.0
        %259 = vmatpush.msra.mxu0 0.0
        %260 = vmatpush.msra.mxu0 0.0
        %261 = vmatpush.msra.mxu0 0.0
        %262 = vmatpush.msra.mxu0 0.0
        %263 = vmatpush.msra.mxu0 0.0
        %264 = vmatpush.msra.mxu0 0.0
        %265 = vmatpush.msra.mxu0 0.0
        %266 = vmatpush.msra.mxu0 0.0
        %267 = vmatpush.msra.mxu0 0.0
        %268 = vmatpush.msra.mxu0 0.0
        %269 = vmatpush.msra.mxu0 %v252
        %270 = vmatpush.msra.mxu0 %v251
        %271 = vmatpush.msra.mxu0 %v250
        %272 = vmatpush.msra.mxu0 %v249
        %273 = vmatmul.f32.gmra.mxu0 %v255
        %v274 = vpop.f32.mrf.mxu0
        %v275 = vadd.f32 0.0, %v274
        %276 = vdwg.mxu0
        %vm277 = vcmask 785408
        %278 = vst.msk [vmem:[#allocation2] sm:$0xff] %vm277, %v275
        %v279 = vlaneseq
        %v280 = vshrl.u32 %v279, 7
        %v281 = vlaneseq
        %v282 = vand.u32 %v281, 127
        %vm283 = vcmp.ge.s32.totalorder %v280, %v282
        %284 = vst.msk [vmem:[#allocation3] sm:$0xff] %vm253, 0.0
        %v285 = vld [vmem:[#allocation2] sm:$0xff]
        %287 = vrot.lane.b32.xlu0 %v285, 96
        %v288 = vpop.permute.xlu0 %287
        %vm289 = vcmask 64512
        %v290 = vsel %vm289, %v285, 0
        %v292 = vsel %vm289, %v288, 0
        %294 = vmatpush.xpose.msra.mxu0 0.0
        %295 = vmatpush.xpose.msra.mxu0 0.0
        %296 = vmatpush.xpose.msra.mxu0 0.0
        %297 = vmatpush.xpose.msra.mxu0 0.0
        %298 = vmatpush.xpose.msra.mxu0 0.0
        %299 = vmatpush.xpose.msra.mxu0 0.0
        %300 = vmatpush.xpose.msra.mxu0 0.0
        %301 = vmatpush.xpose.msra.mxu0 0.0
        %302 = vmatpush.xpose.msra.mxu0 0.0
        %303 = vmatpush.xpose.msra.mxu0 0.0
        %304 = vmatpush.xpose.msra.mxu0 0.0
        %305 = vmatpush.xpose.msra.mxu0 0.0
        %306 = vmatpush.xpose.msra.mxu0 0.0
        %307 = vmatpush.xpose.msra.mxu0 0.0
        %308 = vmatpush.xpose.msra.mxu0 0.0
        %309 = vmatpush.xpose.msra.mxu0 %v292
        %310 = vmatmul.f32.gmra.mxu0 %v290
        %v311 = vpop.f32.mrf.mxu0
        %v312 = vadd.f32 0.0, %v311
        %313 = vdwg.mxu0
        %v314 = vsel %vm283, %v312, -1e+30
        %v315 = vsel %vm289, %v314, -inf
        %316 = vmax.xlane.f32.xlu0 %v315
        %v317 = vpop.xlane.xlu0 %316
        %v318 = vsub.f32 %v314, %v317
        %v319 = vmul.f32 %v318, 1.442695
        %v320 = vpow.pop %v319
        %v321 = vsel %vm289, %v320, 0.0
        %322 = vadd.xlane.f32.xlu0 %v321
        %v323 = vpop.xlane.xlu0 %322
        %v324 = vrcp.pop %v323
        %v325 = vmul.f32 %v320, %v324
        %326 = vrot.lane.b32.xlu0 %v285, 64
        %v327 = vpop.permute.xlu0 %326
        %v330 = vsel %vm289, %v325, 0
        %332 = vmatpush.msra.mxu0 0.0
        %333 = vmatpush.msra.mxu0 0.0
        %334 = vmatpush.msra.mxu0 0.0
        %335 = vmatpush.msra.mxu0 0.0
        %336 = vmatpush.msra.mxu0 0.0
        %337 = vmatpush.msra.mxu0 0.0
        %338 = vmatpush.msra.mxu0 0.0
        %339 = vmatpush.msra.mxu0 0.0
        %340 = vmatpush.msra.mxu0 0.0
        %341 = vmatpush.msra.mxu0 0.0
        %342 = vmatpush.msra.mxu0 0.0
        %343 = vmatpush.msra.mxu0 0.0
        %344 = vmatpush.msra.mxu0 0.0
        %345 = vmatpush.msra.mxu0 0.0
        %346 = vmatpush.msra.mxu0 0.0
        %347 = vmatpush.msra.mxu0 %v327
        %348 = vmatmul.f32.gmra.mxu0 %v330
        %v349 = vpop.f32.mrf.mxu0
        %v350 = vadd.f32 0.0, %v349
        %351 = vdwg.mxu0
        %v352 = vld [vmem:[#allocation3] sm:$0xff]
        %v353 = vld [vmem:[#allocation9] sm:$0xff]
        %v355 = vsel %vm289, %v350, 0
        %357 = vmatpush.msra.mxu0 0.0
        %358 = vmatpush.msra.mxu0 0.0
        %359 = vmatpush.msra.mxu0 0.0
        %360 = vmatpush.msra.mxu0 0.0
        %361 = vmatpush.msra.mxu0 0.0
        %362 = vmatpush.msra.mxu0 0.0
        %363 = vmatpush.msra.mxu0 0.0
        %364 = vmatpush.msra.mxu0 0.0
        %365 = vmatpush.msra.mxu0 0.0
        %366 = vmatpush.msra.mxu0 0.0
        %367 = vmatpush.msra.mxu0 0.0
        %368 = vmatpush.msra.mxu0 0.0
        %369 = vmatpush.msra.mxu0 0.0
        %370 = vmatpush.msra.mxu0 0.0
        %371 = vmatpush.msra.mxu0 0.0
        %372 = vmatpush.msra.mxu0 %v353
        %373 = vmatmul.f32.gmra.mxu0 %v355
        %v374 = vpop.f32.mrf.mxu0
        %v375 = vadd.f32 0.0, %v374
        %376 = vdwg.mxu0
        %v377 = vadd.f32 %v352, %v375
        %378 = vst.msk [vmem:[#allocation3] sm:$0xff] %vm253, %v377
        %v379 = vld [vmem:[#allocation2] sm:$0xff]
        %381 = vrot.lane.b32.xlu0 %v379, 120
        %v382 = vpop.permute.xlu0 %381
        %383 = vrot.lane.b32.xlu0 %v379, 88
        %v384 = vpop.permute.xlu0 %383
        %v385 = vsel %vm289, %v382, 0
        %v387 = vsel %vm289, %v384, 0
        %389 = vmatpush.xpose.msra.mxu0 0.0
        %390 = vmatpush.xpose.msra.mxu0 0.0
        %391 = vmatpush.xpose.msra.mxu0 0.0
        %392 = vmatpush.xpose.msra.mxu0 0.0
        %393 = vmatpush.xpose.msra.mxu0 0.0
        %394 = vmatpush.xpose.msra.mxu0 0.0
        %395 = vmatpush.xpose.msra.mxu0 0.0
        %396 = vmatpush.xpose.msra.mxu0 0.0
        %397 = vmatpush.xpose.msra.mxu0 0.0
        %398 = vmatpush.xpose.msra.mxu0 0.0
        %399 = vmatpush.xpose.msra.mxu0 0.0
        %400 = vmatpush.xpose.msra.mxu0 0.0
        %401 = vmatpush.xpose.msra.mxu0 0.0
        %402 = vmatpush.xpose.msra.mxu0 0.0
        %403 = vmatpush.xpose.msra.mxu0 0.0
        %404 = vmatpush.xpose.msra.mxu0 %v387
        %405 = vmatmul.f32.gmra.mxu0 %v385
        %v406 = vpop.f32.mrf.mxu0
        %v407 = vadd.f32 0.0, %v406
        %408 = vdwg.mxu0
        %v409 = vsel %vm283, %v407, -1e+30
        %v410 = vsel %vm289, %v409, -inf
        %411 = vmax.xlane.f32.xlu0 %v410
        %v412 = vpop.xlane.xlu0 %411
        %v413 = vsub.f32 %v409, %v412
        %v414 = vmul.f32 %v413, 1.442695
        %v415 = vpow.pop %v414
        %v416 = vsel %vm289, %v415, 0.0
        %417 = vadd.xlane.f32.xlu0 %v416
        %v418 = vpop.xlane.xlu0 %417
        %v419 = vrcp.pop %v418
        %v420 = vmul.f32 %v415, %v419
        %421 = vrot.lane.b32.xlu0 %v379, 56
        %v422 = vpop.permute.xlu0 %421
        %v425 = vsel %vm289, %v420, 0
        %427 = vmatpush.msra.mxu0 0.0
        %428 = vmatpush.msra.mxu0 0.0
        %429 = vmatpush.msra.mxu0 0.0
        %430 = vmatpush.msra.mxu0 0.0
        %431 = vmatpush.msra.mxu0 0.0
        %432 = vmatpush.msra.mxu0 0.0
        %433 = vmatpush.msra.mxu0 0.0
        %434 = vmatpush.msra.mxu0 0.0
        %435 = vmatpush.msra.mxu0 0.0
        %436 = vmatpush.msra.mxu0 0.0
        %437 = vmatpush.msra.mxu0 0.0
        %438 = vmatpush.msra.mxu0 0.0
        %439 = vmatpush.msra.mxu0 0.0
        %440 = vmatpush.msra.mxu0 0.0
        %441 = vmatpush.msra.mxu0 0.0
        %442 = vmatpush.msra.mxu0 %v422
        %443 = vmatmul.f32.gmra.mxu0 %v425
        %v444 = vpop.f32.mrf.mxu0
        %v445 = vadd.f32 0.0, %v444
        %446 = vdwg.mxu0
        %v447 = vld [vmem:[#allocation3] sm:$0xff]
        %v448 = vld [vmem:[#allocation9 + $0x8] sm:$0xff]
        %v450 = vsel %vm289, %v445, 0
        %452 = vmatpush.msra.mxu0 0.0
        %453 = vmatpush.msra.mxu0 0.0
        %454 = vmatpush.msra.mxu0 0.0
        %455 = vmatpush.msra.mxu0 0.0
        %456 = vmatpush.msra.mxu0 0.0
        %457 = vmatpush.msra.mxu0 0.0
        %458 = vmatpush.msra.mxu0 0.0
        %459 = vmatpush.msra.mxu0 0.0
        %460 = vmatpush.msra.mxu0 0.0
        %461 = vmatpush.msra.mxu0 0.0
        %462 = vmatpush.msra.mxu0 0.0
        %463 = vmatpush.msra.mxu0 0.0
        %464 = vmatpush.msra.mxu0 0.0
        %465 = vmatpush.msra.mxu0 0.0
        %466 = vmatpush.msra.mxu0 0.0
        %467 = vmatpush.msra.mxu0 %v448
        %468 = vmatmul.f32.gmra.mxu0 %v450
        %v469 = vpop.f32.mrf.mxu0
        %v470 = vadd.f32 0.0, %v469
        %471 = vdwg.mxu0
        %v472 = vadd.f32 %v447, %v470
        %473 = vst.msk [vmem:[#allocation3] sm:$0xff] %vm253, %v472
        %v474 = vld [vmem:[#allocation2] sm:$0xff]
        %476 = vrot.lane.b32.xlu0 %v474, 112
        %v477 = vpop.permute.xlu0 %476
        %478 = vrot.lane.b32.xlu0 %v474, 80
        %v479 = vpop.permute.xlu0 %478
        %v480 = vsel %vm289, %v477, 0
        %v482 = vsel %vm289, %v479, 0
        %484 = vmatpush.xpose.msra.mxu0 0.0
        %485 = vmatpush.xpose.msra.mxu0 0.0
        %486 = vmatpush.xpose.msra.mxu0 0.0
        %487 = vmatpush.xpose.msra.mxu0 0.0
        %488 = vmatpush.xpose.msra.mxu0 0.0
        %489 = vmatpush.xpose.msra.mxu0 0.0
        %490 = vmatpush.xpose.msra.mxu0 0.0
        %491 = vmatpush.xpose.msra.mxu0 0.0
        %492 = vmatpush.xpose.msra.mxu0 0.0
        %493 = vmatpush.xpose.msra.mxu0 0.0
        %494 = vmatpush.xpose.msra.mxu0 0.0
        %495 = vmatpush.xpose.msra.mxu0 0.0
        %496 = vmatpush.xpose.msra.mxu0 0.0
        %497 = vmatpush.xpose.msra.mxu0 0.0
        %498 = vmatpush.xpose.msra.mxu0 0.0
        %499 = vmatpush.xpose.msra.mxu0 %v482
        %500 = vmatmul.f32.gmra.mxu0 %v480
        %v501 = vpop.f32.mrf.mxu0
        %v502 = vadd.f32 0.0, %v501
        %503 = vdwg.mxu0
        %v504 = vsel %vm283, %v502, -1e+30
        %v505 = vsel %vm289, %v504, -inf
        %506 = vmax.xlane.f32.xlu0 %v505
        %v507 = vpop.xlane.xlu0 %506
        %v508 = vsub.f32 %v504, %v507
        %v509 = vmul.f32 %v508, 1.442695
        %v510 = vpow.pop %v509
        %v511 = vsel %vm289, %v510, 0.0
        %512 = vadd.xlane.f32.xlu0 %v511
        %v513 = vpop.xlane.xlu0 %512
        %v514 = vrcp.pop %v513
        %v515 = vmul.f32 %v510, %v514
        %516 = vrot.lane.b32.xlu0 %v474, 48
        %v517 = vpop.permute.xlu0 %516
        %v520 = vsel %vm289, %v515, 0
        %522 = vmatpush.msra.mxu0 0.0
        %523 = vmatpush.msra.mxu0 0.0
        %524 = vmatpush.msra.mxu0 0.0
        %525 = vmatpush.msra.mxu0 0.0
        %526 = vmatpush.msra.mxu0 0.0
        %527 = vmatpush.msra.mxu0 0.0
        %528 = vmatpush.msra.mxu0 0.0
        %529 = vmatpush.msra.mxu0 0.0
        %530 = vmatpush.msra.mxu0 0.0
        %531 = vmatpush.msra.mxu0 0.0
        %532 = vmatpush.msra.mxu0 0.0
        %533 = vmatpush.msra.mxu0 0.0
        %534 = vmatpush.msra.mxu0 0.0
        %535 = vmatpush.msra.mxu0 0.0
        %536 = vmatpush.msra.mxu0 0.0
        %537 = vmatpush.msra.mxu0 %v517
        %538 = vmatmul.f32.gmra.mxu0 %v520
        %v539 = vpop.f32.mrf.mxu0
        %v540 = vadd.f32 0.0, %v539
        %541 = vdwg.mxu0
        %v542 = vld [vmem:[#allocation3] sm:$0xff]
        %v543 = vld [vmem:[#allocation9 + $0x10] sm:$0xff]
        %v545 = vsel %vm289, %v540, 0
        %547 = vmatpush.msra.mxu0 0.0
        %548 = vmatpush.msra.mxu0 0.0
        %549 = vmatpush.msra.mxu0 0.0
        %550 = vmatpush.msra.mxu0 0.0
        %551 = vmatpush.msra.mxu0 0.0
        %552 = vmatpush.msra.mxu0 0.0
        %553 = vmatpush.msra.mxu0 0.0
        %554 = vmatpush.msra.mxu0 0.0
        %555 = vmatpush.msra.mxu0 0.0
        %556 = vmatpush.msra.mxu0 0.0
        %557 = vmatpush.msra.mxu0 0.0
        %558 = vmatpush.msra.mxu0 0.0
        %559 = vmatpush.msra.mxu0 0.0
        %560 = vmatpush.msra.mxu0 0.0
        %561 = vmatpush.msra.mxu0 0.0
        %562 = vmatpush.msra.mxu0 %v543
        %563 = vmatmul.f32.gmra.mxu0 %v545
        %v564 = vpop.f32.mrf.mxu0
        %v565 = vadd.f32 0.0, %v564
        %566 = vdwg.mxu0
        %v567 = vadd.f32 %v542, %v565
        %568 = vst.msk [vmem:[#allocation3] sm:$0xff] %vm253, %v567
        %v569 = vld [vmem:[#allocation2] sm:$0xff]
        %571 = vrot.lane.b32.xlu0 %v569, 104
        %v572 = vpop.permute.xlu0 %571
        %573 = vrot.lane.b32.xlu0 %v569, 72
        %v574 = vpop.permute.xlu0 %573
        %v575 = vsel %vm289, %v572, 0
        %v577 = vsel %vm289, %v574, 0
        %579 = vmatpush.xpose.msra.mxu0 0.0
        %580 = vmatpush.xpose.msra.mxu0 0.0
        %581 = vmatpush.xpose.msra.mxu0 0.0
        %582 = vmatpush.xpose.msra.mxu0 0.0
        %583 = vmatpush.xpose.msra.mxu0 0.0
        %584 = vmatpush.xpose.msra.mxu0 0.0
        %585 = vmatpush.xpose.msra.mxu0 0.0
        %586 = vmatpush.xpose.msra.mxu0 0.0
        %587 = vmatpush.xpose.msra.mxu0 0.0
        %588 = vmatpush.xpose.msra.mxu0 0.0
        %589 = vmatpush.xpose.msra.mxu0 0.0
        %590 = vmatpush.xpose.msra.mxu0 0.0
        %591 = vmatpush.xpose.msra.mxu0 0.0
        %592 = vmatpush.xpose.msra.mxu0 0.0
        %593 = vmatpush.xpose.msra.mxu0 0.0
        %594 = vmatpush.xpose.msra.mxu0 %v577
        %595 = vmatmul.f32.gmra.mxu0 %v575
        %v596 = vpop.f32.mrf.mxu0
        %v597 = vadd.f32 0.0, %v596
        %598 = vdwg.mxu0
        %v599 = vsel %vm283, %v597, -1e+30
        %v600 = vsel %vm289, %v599, -inf
        %601 = vmax.xlane.f32.xlu0 %v600
        %v602 = vpop.xlane.xlu0 %601
        %v603 = vsub.f32 %v599, %v602
        %v604 = vmul.f32 %v603, 1.442695
        %v605 = vpow.pop %v604
        %v606 = vsel %vm289, %v605, 0.0
        %607 = vadd.xlane.f32.xlu0 %v606
        %v608 = vpop.xlane.xlu0 %607
        %v609 = vrcp.pop %v608
        %v610 = vmul.f32 %v605, %v609
        %611 = vrot.lane.b32.xlu0 %v569, 40
        %v612 = vpop.permute.xlu0 %611
        %v615 = vsel %vm289, %v610, 0
        %617 = vmatpush.msra.mxu0 0.0
        %618 = vmatpush.msra.mxu0 0.0
        %619 = vmatpush.msra.mxu0 0.0
        %620 = vmatpush.msra.mxu0 0.0
        %621 = vmatpush.msra.mxu0 0.0
        %622 = vmatpush.msra.mxu0 0.0
        %623 = vmatpush.msra.mxu0 0.0
        %624 = vmatpush.msra.mxu0 0.0
        %625 = vmatpush.msra.mxu0 0.0
        %626 = vmatpush.msra.mxu0 0.0
        %627 = vmatpush.msra.mxu0 0.0
        %628 = vmatpush.msra.mxu0 0.0
        %629 = vmatpush.msra.mxu0 0.0
        %630 = vmatpush.msra.mxu0 0.0
        %631 = vmatpush.msra.mxu0 0.0
        %632 = vmatpush.msra.mxu0 %v612
        %633 = vmatmul.f32.gmra.mxu0 %v615
        %v634 = vpop.f32.mrf.mxu0
        %v635 = vadd.f32 0.0, %v634
        %636 = vdwg.mxu0
        %v637 = vld [vmem:[#allocation3] sm:$0xff]
        %v638 = vld [vmem:[#allocation9 + $0x18] sm:$0xff]
        %v640 = vsel %vm289, %v635, 0
        %642 = vmatpush.msra.mxu0 0.0
        %643 = vmatpush.msra.mxu0 0.0
        %644 = vmatpush.msra.mxu0 0.0
        %645 = vmatpush.msra.mxu0 0.0
        %646 = vmatpush.msra.mxu0 0.0
        %647 = vmatpush.msra.mxu0 0.0
        %648 = vmatpush.msra.mxu0 0.0
        %649 = vmatpush.msra.mxu0 0.0
        %650 = vmatpush.msra.mxu0 0.0
        %651 = vmatpush.msra.mxu0 0.0
        %652 = vmatpush.msra.mxu0 0.0
        %653 = vmatpush.msra.mxu0 0.0
        %654 = vmatpush.msra.mxu0 0.0
        %655 = vmatpush.msra.mxu0 0.0
        %656 = vmatpush.msra.mxu0 0.0
        %657 = vmatpush.msra.mxu0 %v638
        %658 = vmatmul.f32.gmra.mxu0 %v640
        %v659 = vpop.f32.mrf.mxu0
        %v660 = vadd.f32 0.0, %v659
        %661 = vdwg.mxu0
        %v662 = vadd.f32 %v637, %v660
        %663 = vst.msk [vmem:[#allocation3] sm:$0xff] %vm253, %v662
        %v664 = vld [vmem:[#allocation3] sm:$0xff]
        %v665 = vld [vmem:[%s3] sm:$0x1]
        %v667 = vperm.slane %v665, 0
        %v669 = vadd.f32 %v664, %v667
        %670 = vst.msk [vmem:[%s247] sm:$0xff] %vm253, %v669
        %s671 = sand.u32 %s119, 1
        %s672 = scalar_lea.sflag [#allocation6], %s671
        %s673 = sand.u32 %s119, 1
        %s674 = smul.addr %s673, 8
        %s675 = scalar_lea.vmem [#allocation10], %s674
        // Predicated region
        $region49: #{tpu_custom_call.1} parent=35 // pred_check
          %p676 = pneg %p129
        $region50: #{tpu_custom_call.1} parent=35 // pred_check_branch
          %678 = sbr.rel (%p676) target = $region52
        $region51: #{tpu_custom_call.1} parent=35 // pred_region
          %680 = vsyncadd %s672, 0
          %s681 = smul.addr %s22, 8
          %s682 = scalar_lea.hbm %s4, %s681
          %s684 = sshll.u32 %s675, 4
          %s685 = int_to_ptr.vmem [resolvable:$true] %s684
          %s686 = sshll.u32 %s682, 4
          %s687 = int_to_ptr.hbm [resolvable:$true] %s686
          %689 = dma.vmem_to_hbm [thread:$0]  %s685, 128, %s687, %s672
        $region52: #{tpu_custom_call.1} parent=35 // pred_fallthru
          _
      $region36: #{tpu_custom_call.1} parent=5 // pred_fallthru
        _
      %p690 = scmp.le.s32.totalorder 2, %s17
      // Predicated region
      $region53: #{tpu_custom_call.1} parent=5 // pred_check
        %p691 = pneg %p690
      $region54: #{tpu_custom_call.1} parent=5 // pred_check_branch
        %693 = sbr.rel (%p691) target = $region56
      $region55: #{tpu_custom_call.1} parent=5 // pred_region
        %s694 = ssub.s32 %s17, 2
        // Predicated region
        $region57: #{tpu_custom_call.1} parent=55 // pred_check
          %p695 = pneg %p135
        $region58: #{tpu_custom_call.1} parent=55 // pred_check_branch
          %697 = sbr.rel (%p695) target = $region60
        $region59: #{tpu_custom_call.1} parent=55 // pred_region
          %s698 = sand.u32 %s120, 1
          %s699 = scalar_lea.sflag [#allocation6], %s698
          %s700 = sand.u32 %s120, 1
          %s701 = smul.addr %s700, 8
          %s702 = scalar_lea.vmem [#allocation10], %s701
          %704 = dma.done %s699, 128
        $region60: #{tpu_custom_call.1} parent=55 // pred_fallthru
          _
      $region56: #{tpu_custom_call.1} parent=5 // pred_fallthru
        _
    $region6: #{tpu_custom_call.1} parent=1 // loop_footer
      %s21 = sadd.s32 1, %s17
    $region7: #{tpu_custom_call.1} parent=1 // loop_footer_branch
      %16 = sbr.rel target = $region3
    $region8: #{tpu_custom_call.1} parent=1 // loop_exit
      _
    %705 = vsyncpa [#allocation5], 1
    %s706 = scalar_lea.sflag [#allocation5], 1
    %707 = vsyncpa %s706, 1
    %708 = vsyncpa [#allocation8], 1
    %709 = vsyncpa [#allocation6], 1
    %s710 = scalar_lea.sflag [#allocation6], 1
    %711 = vsyncpa %s710, 1

</llo_original>
